<compile_context>
chip_gen: v7x
topology: tpu7x:2x2x1
jax: 0.10.0
libtpu: 0.0.40
codegen_flags: <defaults>
</compile_context>

<pallas_src>
import functools
import math

import jax
import jax.numpy as jnp
import numpy as np
from jax.experimental import pallas as pl
from jax.experimental.pallas import tpu as pltpu


# --------------------------------------------------------------------------- #
# Kernel
# --------------------------------------------------------------------------- #
def _skip_kernel(xp_ref, cp_ref, w_ref, b_ref, out_ref, *, packed_h):
    """One (row-block i, candidate n) grid step.

    xp_ref : (rblk, PH)   f32      packed x (same block across all n -> resident)
    cp_ref : (rblk, PH)   bf16/f32 packed candidate n (leading candidate dim squeezed)
    w_ref  : (PH, 2*PH)   bf16/f32 [block-diag skip_proj | gate-logit broadcast]
    b_ref  : (1, 2*PH)    f32      matching bias
    out_ref: (rblk, PH)   f32      VMEM-resident accumulator / output block
    """
    n = pl.program_id(1)

    # One MXU push: columns [0, PH) are skip_proj outputs per packed row,
    # columns [PH, 2*PH) are the skip_gate logits already broadcast across
    # each H-lane group (no lane-sparse (.,1) matmul, no second matmul).
    h = jnp.dot(cp_ref[...], w_ref[...],
                preferred_element_type=jnp.float32) + b_ref[...]
    proj = h[:, :packed_h]                     # vreg-aligned lane slice
    glog = h[:, packed_h:]                     # vreg-aligned lane slice

    # sigmoid(z) = 1 / (1 + exp(-z)); exp and the approximate reciprocal both
    # run on the (otherwise idle) EUP slot -- keep it off the VALU.
    gate = pl.reciprocal(1.0 + jnp.exp(-glog), approx=True)
    weighted = proj * gate                     # (rblk, PH) f32

    # Candidate axis is an "arbitrary" reduction: accumulate into the
    # VMEM-resident f32 output block; initialize with the residual x on the
    # first candidate step.
    @pl.when(n == 0)
    def _():
        out_ref[...] = xp_ref[...] + weighted

    @pl.when(n > 0)
    def _():
        out_ref[...] = out_ref[...] + weighted


# --------------------------------------------------------------------------- #
# Parameter packing (done once; depends only on the module parameters)
# --------------------------------------------------------------------------- #
def pack_skip_params(w_proj, b_proj, w_gate, b_gate, *, compute_dtype=jnp.bfloat16):
    """Build the fused, lane-packed weight/bias for the kernel.

    w_proj : (H, H)  used as  c @ w_proj  (i.e. the torch Linear weight, transposed)
    b_proj : (H,)
    w_gate : (H,)    used as  c @ w_gate
    b_gate : scalar
    """
    H = w_proj.shape[0]
    assert w_proj.shape == (H, H)
    assert 128 % H == 0, "lane packing assumes H divides 128"
    # TODO(synk): add an unpacked (P=1) / padded fallback for H not dividing 128.
    P = 128 // H
    PH = P * H  # 128 lanes

    eye_p = jnp.eye(P, dtype=jnp.float32)
    w_blk = jnp.kron(eye_p, w_proj.astype(jnp.float32))                     # (PH, PH)
    w_gbc = jnp.kron(eye_p, w_gate.astype(jnp.float32)[:, None]
                     * jnp.ones((1, H), jnp.float32))                        # (PH, PH)
    w_full = jnp.concatenate([w_blk, w_gbc], axis=1).astype(compute_dtype)   # (PH, 2*PH)
    b_full = jnp.concatenate(
        [jnp.tile(b_proj.astype(jnp.float32), P),
         jnp.full((PH,), b_gate, jnp.float32)])[None, :]                     # (1, 2*PH)
    return w_full, b_full


# --------------------------------------------------------------------------- #
# Forward (packed-weight fast path)
# --------------------------------------------------------------------------- #
@functools.partial(jax.jit, static_argnames=("row_block",))
def skip_manager_packed(x, skip_candidates, w_full, b_full, *, row_block=512):
    """SkipManager.forward with precomputed packed parameters.

    x               : (B, S, H) float32
    skip_candidates : (N, B, S, H) float32 (N may be 0)
    w_full, b_full  : from pack_skip_params
    """
    if skip_candidates.shape[0] == 0:          # matches `if not skip_candidates:`
        return x

    B, S, H = x.shape
    N = skip_candidates.shape[0]
    PH = w_full.shape[0]
    P = PH // H
    assert P * H == PH and 128 % H == 0, "lane packing assumes H divides 128"
    assert (B * S) % P == 0, "lane packing assumes B*S divisible by 128//H"
    # TODO(synk): add a padded fallback path for shapes that don't divide.

    RB = (B * S) // P                          # packed rows of x / out
    xp = x.reshape(RB, PH).astype(jnp.float32)                 # pure layout reshape
    cp = skip_candidates.reshape(N, RB, PH).astype(w_full.dtype)

    # Row block: full problem in one step when small; >=512-row blocks at
    # production sizes (v6e roofline), still tiny vs. v5e's 16 MiB scoped VMEM.
    rblk = RB if RB <= row_block else row_block
    grid = (pl.cdiv(RB, rblk), N)

    kernel = functools.partial(_skip_kernel, packed_h=PH)

    out_p = pl.pallas_call(
        kernel,
        out_shape=jax.ShapeDtypeStruct((RB, PH), jnp.float32),
        grid=grid,
        in_specs=[
            pl.BlockSpec((rblk, PH), lambda i, n: (i, 0)),          # xp (resident over n)
            pl.BlockSpec((None, rblk, PH), lambda i, n: (n, i, 0)),  # candidate n
            pl.BlockSpec((PH, 2 * PH), lambda i, n: (0, 0)),        # packed weight (resident)
            pl.BlockSpec((1, 2 * PH), lambda i, n: (0, 0)),         # packed bias   (resident)
        ],
        out_specs=pl.BlockSpec((rblk, PH), lambda i, n: (i, 0)),
        input_output_aliases={0: 0},            # result overwrites the xp buffer
        compiler_params=pltpu.CompilerParams(
            dimension_semantics=("parallel", "arbitrary")),
    )(xp, cp, w_full, b_full)

    return out_p.reshape(B, S, H).astype(x.dtype)


# Convenience end-to-end wrapper (packing fuses into the single jitted call).
@jax.jit
def skip_manager(x, skip_candidates, w_proj, b_proj, w_gate, b_gate):
    if skip_candidates.shape[0] == 0:
        return x
    w_full, b_full = pack_skip_params(w_proj, b_proj, w_gate, b_gate)
    return skip_manager_packed(x, skip_candidates, w_full, b_full)


# --------------------------------------------------------------------------- #
# Pure-JAX reference mirroring the PyTorch forward
# --------------------------------------------------------------------------- #
def reference(x, skip_candidates, w_proj, b_proj, w_gate, b_gate):
    out = x
    for n in range(skip_candidates.shape[0]):
        c = skip_candidates[n]
        gate = jax.nn.sigmoid(c @ w_gate + b_gate)[..., None]   # (B, S, 1)
        out = out + gate * (c @ w_proj + b_proj)
    return out


if __name__ == "__main__":
    B, S, H, N = 2, 16, 32, 3
    key = jax.random.PRNGKey(0)
    kx, kc, kw, kb, kg = jax.random.split(key, 5)

    x = jax.random.normal(kx, (B, S, H), jnp.float32)
    cands = jax.random.normal(kc, (N, B, S, H), jnp.float32)
    w_proj = jax.random.normal(kw, (H, H), jnp.float32) * (1.0 / math.sqrt(H))
    b_proj = jax.random.normal(kb, (H,), jnp.float32) * 0.02
    w_gate = jax.random.normal(kg, (H,), jnp.float32) * (1.0 / math.sqrt(H))
    b_gate = jnp.float32(0.1)

    # Pack once (depends only on the parameters), reuse across all calls.
    w_full, b_full = pack_skip_params(w_proj, b_proj, w_gate, b_gate)

    out = skip_manager_packed(x, cands, w_full, b_full)
    out = jax.block_until_ready(out)

    ref = reference(x, cands, w_proj, b_proj, w_gate, b_gate)
    # Tolerance covers bf16 matmul operands + EUP-approximate sigmoid.
    np.testing.assert_allclose(np.asarray(out), np.asarray(ref),
                               rtol=2e-2, atol=2e-2)

    # Convenience end-to-end path (packing inside one jitted call).
    out2 = jax.block_until_ready(
        skip_manager(x, cands, w_proj, b_proj, w_gate, b_gate))
    np.testing.assert_allclose(np.asarray(out2), np.asarray(ref),
                               rtol=2e-2, atol=2e-2)

    # Empty-candidate branch: forward returns x unchanged (no kernel launch).
    out_empty = skip_manager_packed(x, cands[:0], w_full, b_full)
    np.testing.assert_allclose(np.asarray(out_empty), np.asarray(x))

    print("KERNEL_OK")
</pallas_src>

<mosaic_0001>
module attributes {stable_mosaic.version = 11 : i64} {
  func.func @_skip_kernel(%arg0: i32, %arg1: i32, %arg2: memref<8x128xf32, #tpu.memory_space<vmem>>, %arg3: memref<1x8x128xbf16, #tpu.memory_space<vmem>>, %arg4: memref<128x256xbf16, #tpu.memory_space<vmem>>, %arg5: memref<1x256xf32, #tpu.memory_space<vmem>>, %arg6: memref<8x128xf32, #tpu.memory_space<vmem>>) attributes {dimension_semantics = [#tpu.dimension_semantics<parallel>, #tpu.dimension_semantics<arbitrary>], iteration_bounds = array<i64: 1, 3>, scalar_prefetch = 0 : i64, scratch_operands = 0 : i64, tpu.core_type = #tpu.core_type<tc>, window_params = [{transform_indices = @transform_0, window_bounds = array<i64: 8, 128>}, {transform_indices = @transform_1, window_bounds = array<i64: 1, 8, 128>}, {pipeline_mode = #tpu.pipeline_mode<synchronous>, transform_indices = @transform_2, window_bounds = array<i64: 128, 256>}, {pipeline_mode = #tpu.pipeline_mode<synchronous>, transform_indices = @transform_3, window_bounds = array<i64: 1, 256>}, {transform_indices = @transform_4, window_bounds = array<i64: 8, 128>}]} {
    %c0 = arith.constant 0 : index
    %c0_0 = arith.constant 0 : index
    %c0_1 = arith.constant 0 : index
    %0 = vector.load %arg3[%c0, %c0_0, %c0_1] : memref<1x8x128xbf16, #tpu.memory_space<vmem>>, vector<1x8x128xbf16>
    %1 = vector.shape_cast %0 : vector<1x8x128xbf16> to vector<8x128xbf16>
    %c0_2 = arith.constant 0 : index
    %c0_3 = arith.constant 0 : index
    %2 = vector.load %arg4[%c0_2, %c0_3] : memref<128x256xbf16, #tpu.memory_space<vmem>>, vector<128x256xbf16>
    %cst = arith.constant dense<0.000000e+00> : vector<8x256xf32>
    %3 = tpu.matmul %1, %2, %cst {dimension_numbers = #tpu.dot_dimension_numbers<[1], [0], [0], [1], [0, 0, 1, 1], [], []>} : vector<8x128xbf16>, vector<128x256xbf16>, vector<8x256xf32> -> vector<8x256xf32>
    %c0_4 = arith.constant 0 : index
    %c0_5 = arith.constant 0 : index
    %4 = vector.load %arg5[%c0_4, %c0_5] : memref<1x256xf32, #tpu.memory_space<vmem>>, vector<1x256xf32>
    %5 = vector.broadcast %4 : vector<1x256xf32> to vector<8x256xf32>
    %6 = arith.addf %3, %5 : vector<8x256xf32>
    %7 = vector.extract_strided_slice %6 {offsets = [0, 0], sizes = [8, 128], strides = [1, 1]} : vector<8x256xf32> to vector<8x128xf32>
    %8 = vector.extract_strided_slice %6 {offsets = [0, 128], sizes = [8, 128], strides = [1, 1]} : vector<8x256xf32> to vector<8x128xf32>
    %cst_6 = arith.constant 0.000000e+00 : f32
    %9 = vector.broadcast %cst_6 : f32 to vector<8x128xf32>
    %10 = arith.subf %9, %8 : vector<8x128xf32>
    %11 = math.exp %10 : vector<8x128xf32>
    %cst_7 = arith.constant 1.000000e+00 : f32
    %12 = vector.broadcast %cst_7 : f32 to vector<8x128xf32>
    %13 = arith.addf %12, %11 : vector<8x128xf32>
    %14 = tpu.reciprocal %13 {approx = true} : vector<8x128xf32> -> vector<8x128xf32>
    %15 = arith.mulf %7, %14 : vector<8x128xf32>
    %c0_i32 = arith.constant 0 : i32
    %16 = arith.cmpi eq, %arg1, %c0_i32 : i32
    %17 = arith.extui %16 : i1 to i32
    %c0_i32_8 = arith.constant 0 : i32
    %18 = arith.cmpi ne, %17, %c0_i32_8 : i32
    scf.if %18 {
      %c0_11 = arith.constant 0 : index
      %c0_12 = arith.constant 0 : index
      %22 = vector.load %arg2[%c0_11, %c0_12] : memref<8x128xf32, #tpu.memory_space<vmem>>, vector<8x128xf32>
      %23 = arith.addf %22, %15 : vector<8x128xf32>
      %c0_13 = arith.constant 0 : index
      %c0_14 = arith.constant 0 : index
      %24 = vector.load %arg6[%c0_13, %c0_14] : memref<8x128xf32, #tpu.memory_space<vmem>>, vector<8x128xf32>
      tpu.vector_store %arg6[%c0_13, %c0_14], %23 {strides = array<i32>} : memref<8x128xf32, #tpu.memory_space<vmem>>, vector<8x128xf32>,
    } else {
    }
    %c0_i32_9 = arith.constant 0 : i32
    %19 = arith.cmpi sgt, %arg1, %c0_i32_9 : i32
    %20 = arith.extui %19 : i1 to i32
    %c0_i32_10 = arith.constant 0 : i32
    %21 = arith.cmpi ne, %20, %c0_i32_10 : i32
    scf.if %21 {
      %c0_11 = arith.constant 0 : index
      %c0_12 = arith.constant 0 : index
      %22 = vector.load %arg6[%c0_11, %c0_12] : memref<8x128xf32, #tpu.memory_space<vmem>>, vector<8x128xf32>
      %23 = arith.addf %22, %15 : vector<8x128xf32>
      %c0_13 = arith.constant 0 : index
      %c0_14 = arith.constant 0 : index
      %24 = vector.load %arg6[%c0_13, %c0_14] : memref<8x128xf32, #tpu.memory_space<vmem>>, vector<8x128xf32>
      tpu.vector_store %arg6[%c0_13, %c0_14], %23 {strides = array<i32>} : memref<8x128xf32, #tpu.memory_space<vmem>>, vector<8x128xf32>,
    } else {
    }
    return
  }
  func.func @transform_0(%arg0: i32, %arg1: i32) -> (i32, i32) {
    %c0_i32 = arith.constant 0 : i32
    %c0_i32_0 = arith.constant 0 : i32
    return %arg0, %c0_i32 : i32, i32
  }
  func.func @transform_1(%arg0: i32, %arg1: i32) -> (i32, i32, i32) {
    %c0_i32 = arith.constant 0 : i32
    %c0_i32_0 = arith.constant 0 : i32
    return %arg1, %arg0, %c0_i32 : i32, i32, i32
  }
  func.func @transform_2(%arg0: i32, %arg1: i32) -> (i32, i32) {
    %c0_i32 = arith.constant 0 : i32
    %c0_i32_0 = arith.constant 0 : i32
    %c0_i32_1 = arith.constant 0 : i32
    return %c0_i32, %c0_i32_0 : i32, i32
  }
  func.func @transform_3(%arg0: i32, %arg1: i32) -> (i32, i32) {
    %c0_i32 = arith.constant 0 : i32
    %c0_i32_0 = arith.constant 0 : i32
    %c0_i32_1 = arith.constant 0 : i32
    return %c0_i32, %c0_i32_0 : i32, i32
  }
  func.func @transform_4(%arg0: i32, %arg1: i32) -> (i32, i32) {
    %c0_i32 = arith.constant 0 : i32
    %c0_i32_0 = arith.constant 0 : i32
    return %arg0, %c0_i32 : i32, i32
  }
}

</mosaic_0001>

<llo_original>
// kernel: skip_manager_packed.1
$region0: #{skip_manager_packed.1}
  #allocation0 [shape = 'u32[]', space=smem, size = 0x4, offset = 0x4, fixed_abs, tag = 'smem constant byte address 0x4 - core index']
  #allocation1 [shape = 'u32[144,128]{1,0:T(1,128)}', space=vmem, size = 0x12000, scoped, tag = 'internal scratch']
  %s0 = inlined_call_operand.vmem [shape: f32[8,128], index: 0, kind: input, shape index: {}, may-alias: {0,4}]
  %s1 = inlined_call_operand.vmem [shape: bf16[3,8,128], index: 1, kind: input, shape index: {}]
  %s2 = inlined_call_operand.vmem [shape: bf16[128,256], index: 2, kind: input, shape index: {}]
  %s3 = inlined_call_operand.vmem [shape: f32[1,256], index: 3, kind: input, shape index: {}]
  %s4 = inlined_call_operand.vmem [shape: f32[8,128], index: 4, kind: output, shape index: {}, may-alias: {0,4}]
  %s5 = sld [smem:[#allocation0]]
  $region57: #{skip_manager_packed.1} parent=0
    _
  %s7 = ssub.s32 1, %s5
  %s8 = scalar_select 0, %s7, %s5
  loop: start=0, step=1, limit=5
  $region2: #{skip_manager_packed.1} parent=0 // loop_pre_header
    _
  $region3: #{skip_manager_packed.1} parent=0 // loop_header
    %s10 = sphi 0, %s14
    %p11 = scmp.ge.s32.totalorder %s10, 5
    %s17 = sphi 0, %s29
    %s18 = sphi 0, %s25
    %s19 = sphi 0, %s17
    %s20 = sphi 0, %s18
    %s21 = sphi 0, %s19
    %s22 = sphi 0, %s20
    %s32 = sphi 0, %s34
    %s35 = sphi 0, %s32
    %s36 = sphi 0, %s35
    %s52 = sphi 0, %s36
    %s60 = sphi 0, %s62
    %s63 = sphi 0, %s60
    %s64 = sphi 0, %s63
    %s80 = sphi 0, %s64
    %s84 = sphi 0, %s84
    %s86 = sphi 0, %s84
    %s87 = sphi 0, %s86
    %s101 = sphi 0, %s87
    %s105 = sphi 0, %s105
    %s107 = sphi 0, %s105
    %s108 = sphi 0, %s107
    %s122 = sphi 0, %s108
    %s128 = sphi 0, %s130
    %s131 = sphi 0, %s128
    %s132 = sphi 0, %s131
    %s148 = sphi 0, %s132
  $region4: #{skip_manager_packed.1} parent=0 // loop_header_branch
    %13 = sbr.rel (%p11) target = $region8
  $region5: #{skip_manager_packed.1} parent=0 // loop_body
    %s15 = ssub.s32 %s10, 1
    %s16 = ssub.s32 %s10, 2
    %s23 = sadd.s32 1, %s18
    %p24 = scmp.ge.s32.totalorder %s23, 3
    %s25 = scalar_select %p24, 0, %s23
    %s26 = sadd.s32 1, %s17
    %s27 = scalar_select %p24, %s26, %s17
    %p28 = scmp.ge.s32.totalorder %s27, 1
    %s29 = scalar_select %p28, 0, %s27
    %s30 = ssub.s32 %s17, %s29
    %p31 = scmp.eq.s32.totalorder %s30, 0
    %s33 = sadd.s32 %s32, 1
    %s34 = scalar_select %p31, %s32, %s33
    %p37 = pneg %p31
    %p38 = scmp.eq.s32.totalorder %s10, 2
    %p39 = por %p37, %p38
    %p40 = scmp.ne.s32.totalorder %s32, %s35
    %p41 = scmp.eq.s32.totalorder %s10, 0
    %p42 = por %p40, %p41
    %p43 = scmp.ne.s32.totalorder %s32, %s35
    %p44 = scmp.eq.s32.totalorder %s15, 2
    %p45 = por %p43, %p44
    %p46 = scmp.ne.s32.totalorder %s35, %s36
    %p47 = scmp.eq.s32.totalorder %s15, 0
    %p48 = por %p46, %p47
    %p49 = scmp.ne.s32.totalorder %s35, %s36
    %p50 = scmp.eq.s32.totalorder %s16, 2
    %p51 = por %p49, %p50
    %p53 = scmp.ne.s32.totalorder %s36, %s52
    %p54 = scmp.eq.s32.totalorder %s16, 0
    %p55 = por %p53, %p54
    %s56 = ssub.s32 %s18, %s25
    %s57 = ssub.s32 %s17, %s29
    %s58 = sor.u32 %s56, %s57
    %p59 = scmp.eq.s32.totalorder %s58, 0
    %s61 = sadd.s32 %s60, 1
    %s62 = scalar_select %p59, %s60, %s61
    %p65 = pneg %p59
    %p66 = scmp.eq.s32.totalorder %s10, 2
    %p67 = por %p65, %p66
    %p68 = scmp.ne.s32.totalorder %s60, %s63
    %p69 = scmp.eq.s32.totalorder %s10, 0
    %p70 = por %p68, %p69
    %p71 = scmp.ne.s32.totalorder %s60, %s63
    %p72 = scmp.eq.s32.totalorder %s15, 2
    %p73 = por %p71, %p72
    %p74 = scmp.ne.s32.totalorder %s63, %s64
    %p75 = scmp.eq.s32.totalorder %s15, 0
    %p76 = por %p74, %p75
    %p77 = scmp.ne.s32.totalorder %s63, %s64
    %p78 = scmp.eq.s32.totalorder %s16, 2
    %p79 = por %p77, %p78
    %p81 = scmp.ne.s32.totalorder %s64, %s80
    %p82 = scmp.eq.s32.totalorder %s16, 0
    %p83 = por %p81, %p82
    %s85 = sadd.s32 %s84, 1
    %p88 = scmp.eq.s32.totalorder %s10, 2
    %p89 = scmp.ne.s32.totalorder %s84, %s86
    %p90 = scmp.eq.s32.totalorder %s10, 0
    %p91 = por %p89, %p90
    %p92 = scmp.ne.s32.totalorder %s84, %s86
    %p93 = scmp.eq.s32.totalorder %s15, 2
    %p94 = por %p92, %p93
    %p95 = scmp.ne.s32.totalorder %s86, %s87
    %p96 = scmp.eq.s32.totalorder %s15, 0
    %p97 = por %p95, %p96
    %p98 = scmp.ne.s32.totalorder %s86, %s87
    %p99 = scmp.eq.s32.totalorder %s16, 2
    %p100 = por %p98, %p99
    %p102 = scmp.ne.s32.totalorder %s87, %s101
    %p103 = scmp.eq.s32.totalorder %s16, 0
    %p104 = por %p102, %p103
    %s106 = sadd.s32 %s105, 1
    %p109 = scmp.eq.s32.totalorder %s10, 2
    %p110 = scmp.ne.s32.totalorder %s105, %s107
    %p111 = scmp.eq.s32.totalorder %s10, 0
    %p112 = por %p110, %p111
    %p113 = scmp.ne.s32.totalorder %s105, %s107
    %p114 = scmp.eq.s32.totalorder %s15, 2
    %p115 = por %p113, %p114
    %p116 = scmp.ne.s32.totalorder %s107, %s108
    %p117 = scmp.eq.s32.totalorder %s15, 0
    %p118 = por %p116, %p117
    %p119 = scmp.ne.s32.totalorder %s107, %s108
    %p120 = scmp.eq.s32.totalorder %s16, 2
    %p121 = por %p119, %p120
    %p123 = scmp.ne.s32.totalorder %s108, %s122
    %p124 = scmp.eq.s32.totalorder %s16, 0
    %p125 = por %p123, %p124
    %s126 = ssub.s32 %s17, %s29
    %p127 = scmp.eq.s32.totalorder %s126, 0
    %s129 = sadd.s32 %s128, 1
    %s130 = scalar_select %p127, %s128, %s129
    %p133 = pneg %p127
    %p134 = scmp.eq.s32.totalorder %s10, 2
    %p135 = por %p133, %p134
    %p136 = scmp.ne.s32.totalorder %s128, %s131
    %p137 = scmp.eq.s32.totalorder %s10, 0
    %p138 = por %p136, %p137
    %p139 = scmp.ne.s32.totalorder %s128, %s131
    %p140 = scmp.eq.s32.totalorder %s15, 2
    %p141 = por %p139, %p140
    %p142 = scmp.ne.s32.totalorder %s131, %s132
    %p143 = scmp.eq.s32.totalorder %s15, 0
    %p144 = por %p142, %p143
    %p145 = scmp.ne.s32.totalorder %s131, %s132
    %p146 = scmp.eq.s32.totalorder %s16, 2
    %p147 = por %p145, %p146
    %p149 = scmp.ne.s32.totalorder %s132, %s148
    %p150 = scmp.eq.s32.totalorder %s16, 0
    %p151 = por %p149, %p150
    %p152 = scmp.le.s32.totalorder 1, %s10
    %p153 = scmp.lt.s32.totalorder %s10, 4
    %p154 = pnand %p152, %p153
    %p155 = pneg %p154
    // Predicated region
    $region9: #{skip_manager_packed.1} parent=5 // pred_check
      _
    $region10: #{skip_manager_packed.1} parent=5 // pred_check_branch
      %157 = sbr.rel (%p154) target = $region12
    $region11: #{skip_manager_packed.1} parent=5 // pred_region
      %s158 = ssub.s32 %s10, 1
      // Predicated region
      $region13: #{skip_manager_packed.1} parent=11 // pred_check
        %p159 = pneg %p48
      $region14: #{skip_manager_packed.1} parent=11 // pred_check_branch
        %161 = sbr.rel (%p159) target = $region16
      $region15: #{skip_manager_packed.1} parent=11 // pred_region
        %p162 = scmp.lt.s32.totalorder %s19, 0
        %s163 = scalar_select %p162, %s19, 0
        %s164 = smul.addr %s163, 8
        %s165 = scalar_lea.vmem %s0, %s164
      $region16: #{skip_manager_packed.1} parent=11 // pred_fallthru
        _
      // Predicated region
      $region17: #{skip_manager_packed.1} parent=11 // pred_check
        %p166 = pneg %p97
      $region18: #{skip_manager_packed.1} parent=11 // pred_check_branch
        %168 = sbr.rel (%p166) target = $region20
      $region19: #{skip_manager_packed.1} parent=11 // pred_region
        _
      $region20: #{skip_manager_packed.1} parent=11 // pred_fallthru
        _
      // Predicated region
      $region21: #{skip_manager_packed.1} parent=11 // pred_check
        %p169 = pneg %p118
      $region22: #{skip_manager_packed.1} parent=11 // pred_check_branch
        %171 = sbr.rel (%p169) target = $region24
      $region23: #{skip_manager_packed.1} parent=11 // pred_region
        _
      $region24: #{skip_manager_packed.1} parent=11 // pred_fallthru
        _
    $region12: #{skip_manager_packed.1} parent=5 // pred_fallthru
      _
    %p172 = scmp.lt.s32.totalorder %s10, 3
    // Predicated region
    $region25: #{skip_manager_packed.1} parent=5 // pred_check
      %p173 = pneg %p172
    $region26: #{skip_manager_packed.1} parent=5 // pred_check_branch
      %175 = sbr.rel (%p173) target = $region28
    $region27: #{skip_manager_packed.1} parent=5 // pred_region
      // Predicated region
      $region29: #{skip_manager_packed.1} parent=27 // pred_check
        %p176 = pneg %p70
      $region30: #{skip_manager_packed.1} parent=27 // pred_check_branch
        %178 = sbr.rel (%p176) target = $region32
      $region31: #{skip_manager_packed.1} parent=27 // pred_region
        %p179 = scmp.lt.s32.totalorder %s18, 2
        %s180 = scalar_select %p179, %s18, 2
        %p181 = scmp.lt.s32.totalorder %s17, 0
        %s182 = scalar_select %p181, %s17, 0
        %s183 = sadd.s32 %s182, %s180
        %s184 = smul.addr %s183, 4
        %s185 = scalar_lea.vmem %s1, %s184
      $region32: #{skip_manager_packed.1} parent=27 // pred_fallthru
        _
    $region28: #{skip_manager_packed.1} parent=5 // pred_fallthru
      _
    %p186 = scmp.le.s32.totalorder 1, %s10
    %p187 = scmp.lt.s32.totalorder %s10, 4
    %p188 = pnand %p186, %p187
    %p189 = pneg %p188
    // Predicated region
    $region33: #{skip_manager_packed.1} parent=5 // pred_check
      _
    $region34: #{skip_manager_packed.1} parent=5 // pred_check_branch
      %191 = sbr.rel (%p188) target = $region36
    $region35: #{skip_manager_packed.1} parent=5 // pred_region
      %s192 = ssub.s32 %s10, 1
      %p193 = scmp.lt.s32.totalorder %s19, 0
      %s194 = scalar_select %p193, %s19, 0
      %s195 = smul.addr %s194, 8
      %s196 = scalar_lea.vmem %s0, %s195
      %p197 = pneg %p48
      %p198 = pneg %p45
      %p199 = scmp.lt.s32.totalorder %s20, 2
      %s200 = scalar_select %p199, %s20, 2
      %p201 = scmp.lt.s32.totalorder %s19, 0
      %s202 = scalar_select %p201, %s19, 0
      %s203 = sadd.s32 %s202, %s200
      %s204 = smul.addr %s203, 4
      %s205 = scalar_lea.vmem %s1, %s204
      %p206 = pneg %p76
      %p207 = pneg %p73
      %p208 = pneg %p97
      %p209 = pneg %p94
      %p210 = pneg %p118
      %p211 = pneg %p115
      %p212 = pneg %p144
      %p213 = pneg %p141
      %p214 = scmp.lt.s32.totalorder %s19, 0
      %s215 = scalar_select %p214, %s19, 0
      %s216 = smul.addr %s215, 8
      %s217 = scalar_lea.vmem %s4, %s216
      %p218 = scmp.lt.s32.totalorder %s19, 0
      %s219 = scalar_select %p218, %s19, 0
      %s220 = smul.addr %s219, 8
      %s221 = scalar_lea.vmem %s0, %s220
      %p222 = scmp.lt.s32.totalorder %s20, 2
      %s223 = scalar_select %p222, %s20, 2
      %p224 = scmp.lt.s32.totalorder %s19, 0
      %s225 = scalar_select %p224, %s19, 0
      %s226 = sadd.s32 %s225, %s223
      %s227 = smul.addr %s226, 4
      %s228 = scalar_lea.vmem %s1, %s227
      %p229 = scmp.lt.s32.totalorder %s19, 0
      %s230 = scalar_select %p229, %s19, 0
      %s231 = smul.addr %s230, 8
      %s232 = scalar_lea.vmem %s4, %s231
      %v234 = vld [vmem:[%s228] sm:$0xf]
      %v235 = vld [vmem:[%s2] sm:$0xff]
      %v236 = vld [vmem:[%s2 + $0x8] sm:$0xff]
      %v237 = vld [vmem:[%s2 + $0x10] sm:$0xff]
      %v238 = vld [vmem:[%s2 + $0x18] sm:$0xff]
      %v239 = vld [vmem:[%s2 + $0x20] sm:$0xff]
      %v240 = vld [vmem:[%s2 + $0x28] sm:$0xff]
      %v241 = vld [vmem:[%s2 + $0x30] sm:$0xff]
      %v242 = vld [vmem:[%s2 + $0x38] sm:$0xff]
      %v243 = vld [vmem:[%s2 + $0x40] sm:$0xff]
      %v244 = vld [vmem:[%s2 + $0x48] sm:$0xff]
      %v245 = vld [vmem:[%s2 + $0x50] sm:$0xff]
      %v246 = vld [vmem:[%s2 + $0x58] sm:$0xff]
      %v247 = vld [vmem:[%s2 + $0x60] sm:$0xff]
      %v248 = vld [vmem:[%s2 + $0x68] sm:$0xff]
      %v249 = vld [vmem:[%s2 + $0x70] sm:$0xff]
      %v250 = vld [vmem:[%s2 + $0x78] sm:$0xff]
      %v251 = vld [vmem:[%s3] sm:$0x3]
      %v253 = vlaneseq
      %v254 = vshrl.u32 %v253, 7
      %v255 = vsub.s32 0, %v254
      %v256 = vrot.slane %v251, %v255
      %v257 = vlaneseq
      %v258 = vshrl.u32 %v257, 7
      %v259 = vsub.s32 1, %v258
      %v260 = vrot.slane %v251, %v259
      %v279 = vunpack.c.l.b16 %v235
      %v280 = vunpack.c.h.b16 %v235
      %v281 = vunpack.c.l.b16 %v236
      %v282 = vunpack.c.h.b16 %v236
      %v283 = vunpack.c.l.b16 %v237
      %v284 = vunpack.c.h.b16 %v237
      %v285 = vunpack.c.l.b16 %v238
      %v286 = vunpack.c.h.b16 %v238
      %v287 = vunpack.c.l.b16 %v239
      %v288 = vunpack.c.h.b16 %v239
      %v289 = vunpack.c.l.b16 %v240
      %v290 = vunpack.c.h.b16 %v240
      %v291 = vunpack.c.l.b16 %v241
      %v292 = vunpack.c.h.b16 %v241
      %v293 = vunpack.c.l.b16 %v242
      %v294 = vunpack.c.h.b16 %v242
      %v295 = vunpack.c.l.b16 %v243
      %v296 = vunpack.c.h.b16 %v243
      %v297 = vunpack.c.l.b16 %v244
      %v298 = vunpack.c.h.b16 %v244
      %v299 = vunpack.c.l.b16 %v245
      %v300 = vunpack.c.h.b16 %v245
      %v301 = vunpack.c.l.b16 %v246
      %v302 = vunpack.c.h.b16 %v246
      %v303 = vunpack.c.l.b16 %v247
      %v304 = vunpack.c.h.b16 %v247
      %v305 = vunpack.c.l.b16 %v248
      %v306 = vunpack.c.h.b16 %v248
      %v307 = vunpack.c.l.b16 %v249
      %v308 = vunpack.c.h.b16 %v249
      %v309 = vunpack.c.l.b16 %v250
      %v310 = vunpack.c.h.b16 %v250
      %v311 = vpack.c.b16 %v281, %v279
      %v312 = vpack.c.b16 %v282, %v280
      %v313 = vpack.c.b16 %v285, %v283
      %v314 = vpack.c.b16 %v286, %v284
      %v315 = vpack.c.b16 %v289, %v287
      %v316 = vpack.c.b16 %v290, %v288
      %v317 = vpack.c.b16 %v293, %v291
      %v318 = vpack.c.b16 %v294, %v292
      %v319 = vpack.c.b16 %v297, %v295
      %v320 = vpack.c.b16 %v298, %v296
      %v321 = vpack.c.b16 %v301, %v299
      %v322 = vpack.c.b16 %v302, %v300
      %v323 = vpack.c.b16 %v305, %v303
      %v324 = vpack.c.b16 %v306, %v304
      %v325 = vpack.c.b16 %v309, %v307
      %v326 = vpack.c.b16 %v310, %v308
      %343 = vmatprep.subr.bf16.mxu0 %v312
      %344 = vmatpush1.bf16.msra.mxu0 %v311
      %345 = vmatprep.subr.bf16.mxu0 %v314
      %346 = vmatpush1.bf16.msra.mxu0 %v313
      %347 = vmatprep.subr.bf16.mxu0 %v316
      %348 = vmatpush1.bf16.msra.mxu0 %v315
      %349 = vmatprep.subr.bf16.mxu0 %v318
      %350 = vmatpush1.bf16.msra.mxu0 %v317
      %351 = vmatprep.subr.bf16.mxu0 %v320
      %352 = vmatpush1.bf16.msra.mxu0 %v319
      %353 = vmatprep.subr.bf16.mxu0 %v322
      %354 = vmatpush1.bf16.msra.mxu0 %v321
      %355 = vmatprep.subr.bf16.mxu0 %v324
      %356 = vmatpush1.bf16.msra.mxu0 %v323
      %357 = vmatprep.subr.bf16.mxu0 %v326
      %358 = vmatpush1.bf16.msra.mxu0 %v325
      %359 = vmatprep.subr.bf16.mxu0 0
      %360 = vmatpush1.bf16.msra.mxu0 0
      %361 = vmatprep.subr.bf16.mxu0 0
      %362 = vmatpush1.bf16.msra.mxu0 0
      %363 = vmatprep.subr.bf16.mxu0 0
      %364 = vmatpush1.bf16.msra.mxu0 0
      %365 = vmatprep.subr.bf16.mxu0 0
      %366 = vmatpush1.bf16.msra.mxu0 0
      %367 = vmatprep.subr.bf16.mxu0 0
      %368 = vmatpush1.bf16.msra.mxu0 0
      %369 = vmatprep.subr.bf16.mxu0 0
      %370 = vmatpush1.bf16.msra.mxu0 0
      %371 = vmatprep.subr.bf16.mxu0 0
      %372 = vmatpush1.bf16.msra.mxu0 0
      %373 = vmatprep.subr.bf16.mxu0 0
      %374 = vmatpush1.bf16.msra.mxu0 0
      %375 = vmatprep.mubr.bf16.mxu0 0
      %376 = vmatmul.mubr.bf16.gmra.mrb[0].mxu0 %v234
      %v377 = vpop.f32.mrb[0].mxu0
      %v378 = vadd.f32 %v256, %v377
      %v379 = vpop.f32.mrb[0].mxu0
      %v380 = vadd.f32 %v260, %v379
      %v381 = vpop.f32.mrb[0].mxu0
      %v382 = vpop.f32.mrb[0].mxu0
      %383 = vdwg.mxu0
      %v384 = vsub.f32 0.0, %v380
      %v385 = vmul.f32 %v384, 1.442695
      %v386 = vpow.pop %v385
      %v387 = vadd.f32 %v386, 1.0
      %v388 = vrcp.pop %v387
      %v389 = vmul.f32 %v378, %v388
      %p390 = scmp.eq.s32.totalorder %s20, 0
      // Predicated region
      $region37: #{skip_manager_packed.1} parent=35 // pred_check
        %p391 = pneg %p390
      $region38: #{skip_manager_packed.1} parent=35 // pred_check_branch
        %393 = sbr.rel (%p391) target = $region40
      $region39: #{skip_manager_packed.1} parent=35 // pred_region
        %v394 = vld [vmem:[%s221] sm:$0xff]
        %v395 = vadd.f32 %v394, %v389
        %396 = vst [vmem:[%s232] sm:$0xff] %v395
      $region40: #{skip_manager_packed.1} parent=35 // pred_fallthru
        _
      %p397 = scmp.gt.s32.totalorder %s20, 0
      // Predicated region
      $region41: #{skip_manager_packed.1} parent=35 // pred_check
        %p398 = pneg %p397
      $region42: #{skip_manager_packed.1} parent=35 // pred_check_branch
        %400 = sbr.rel (%p398) target = $region44
      $region43: #{skip_manager_packed.1} parent=35 // pred_region
        %v401 = vld [vmem:[%s232] sm:$0xff]
        %v402 = vadd.f32 %v401, %v389
        %403 = vst [vmem:[%s232] sm:$0xff] %v402
      $region44: #{skip_manager_packed.1} parent=35 // pred_fallthru
        _
      %p404 = scmp.lt.s32.totalorder %s19, 0
      %s405 = scalar_select %p404, %s19, 0
      %s406 = smul.addr %s405, 8
      %s407 = scalar_lea.vmem %s4, %s406
      // Predicated region
      $region45: #{skip_manager_packed.1} parent=35 // pred_check
        %p408 = pneg %p141
      $region46: #{skip_manager_packed.1} parent=35 // pred_check_branch
        %410 = sbr.rel (%p408) target = $region48
      $region47: #{skip_manager_packed.1} parent=35 // pred_region
        _
      $region48: #{skip_manager_packed.1} parent=35 // pred_fallthru
        _
      // Predicated region
      $region49: #{skip_manager_packed.1} parent=35 // pred_check
        %p411 = pneg %p141
      $region50: #{skip_manager_packed.1} parent=35 // pred_check_branch
        %413 = sbr.rel (%p411) target = $region52
      $region51: #{skip_manager_packed.1} parent=35 // pred_region
        %p414 = scmp.lt.s32.totalorder %s19, 0
        %s415 = scalar_select %p414, %s19, 0
        %s416 = smul.addr %s415, 8
        %s417 = scalar_lea.vmem %s4, %s416
      $region52: #{skip_manager_packed.1} parent=35 // pred_fallthru
        _
    $region36: #{skip_manager_packed.1} parent=5 // pred_fallthru
      _
    %p418 = scmp.le.s32.totalorder 2, %s10
    // Predicated region
    $region53: #{skip_manager_packed.1} parent=5 // pred_check
      %p419 = pneg %p418
    $region54: #{skip_manager_packed.1} parent=5 // pred_check_branch
      %421 = sbr.rel (%p419) target = $region56
    $region55: #{skip_manager_packed.1} parent=5 // pred_region
      %s422 = ssub.s32 %s10, 2
    $region56: #{skip_manager_packed.1} parent=5 // pred_fallthru
      _
  $region6: #{skip_manager_packed.1} parent=0 // loop_footer
    %s14 = sadd.s32 1, %s10
  $region7: #{skip_manager_packed.1} parent=0 // loop_footer_branch
    %9 = sbr.rel target = $region3
  $region8: #{skip_manager_packed.1} parent=0 // loop_exit
    _

</llo_original>
